<compile_context>
chip_gen: v6e
topology: v6e:2x2x1
jax: 0.10.0
libtpu: 0.0.40
codegen_flags: <defaults>
</compile_context>

<pallas_src>
import functools

import jax
import jax.numpy as jnp
from jax.experimental import pallas as pl
from jax.experimental.pallas import tpu as pltpu


def _round_up(x, m):
    return (x + m - 1) // m * m


def _vmem_budget_bytes():
    """75% of physical VMEM (v5e/v6e 128 MiB -> 96 MiB, v7x 64 MiB -> 48 MiB),
    leaving headroom for Mosaic internal scratch.  Falls back to a v7x-safe
    figure if the query is unavailable."""
    try:
        cap = int(pltpu.get_tpu_info().vmem_capacity_bytes)
    except Exception:
        cap = 64 * 1024 * 1024
    return (3 * cap) // 4


def _odefunc_kernel(y_ref, w1_ref, b1_ref, w2_ref, b2_ref, o_ref,
                    *, ode_type, backwards):
    # Feed the MXU in the native dtype (bf16 stays bf16); accumulate in f32.
    y_in = y_ref[...]

    # gradient_net(y): Linear -> Tanh -> Linear  (fused, all in VMEM / MXU)
    pre = (jnp.dot(y_in, w1_ref[...], preferred_element_type=jnp.float32)
           + b1_ref[...].astype(jnp.float32))
    # Fused cast: the f32 (bm, HmidP) intermediate never persists when the
    # second matmul's operand dtype is bf16.
    h = jnp.tanh(pre).astype(w2_ref.dtype)
    dy_dt = (jnp.dot(h, w2_ref[...], preferred_element_type=jnp.float32)
             + b2_ref[...].astype(jnp.float32))

    # gradient_func(y, dy_dt) -- selected statically at trace time.
    # Elementwise math kept in f32 (v5e VPU/EUP have no bf16).
    if ode_type == "normal":
        grad = dy_dt
    elif ode_type == "sta":
        grad = dy_dt - y_in.astype(jnp.float32)
    elif ode_type == "orth":
        y_f32 = y_in.astype(jnp.float32)
        num = jnp.sum(dy_dt * y_f32, axis=-1, keepdims=True)
        den = jnp.sum(y_f32 * y_f32, axis=-1, keepdims=True)
        # EUP reciprocal (own VLIW slot) + epsilon guard against zero rows.
        inv = pl.reciprocal(den + jnp.float32(1e-12), approx=True)
        grad = dy_dt - (num * inv) * y_f32
    else:
        raise NotImplementedError(f"{ode_type} is not implemented")

    if backwards:
        grad = -grad

    o_ref[...] = grad.astype(o_ref.dtype)


def prepare_params(w1, b1, w2, b2, *, compute_dtype=None):
    """One-time parameter prep.

    w1: (H, Hmid)  -- torch nn.Linear weight (out, in) ALREADY transposed to (in, out)
    b1: (Hmid,) or (1, Hmid)
    w2: (Hmid, H)  -- already transposed to (in, out)
    b2: (H,) or (1, H)

    Only the inner hidden dim Hmid is zero-padded to a multiple of 128 so the
    intermediate matmuls are lane-dense; the I/O feature dim H stays unpadded
    (activation blocks use the full last dim, a legal TPU block shape), so the
    wrapper never pads / slices y.  Zero padding is exact: padded pre-acts are
    tanh(0)=0 and multiply zero-padded W2 rows.
    """
    H, Hmid = w1.shape
    b1 = jnp.reshape(b1, (1, -1))
    b2 = jnp.reshape(b2, (1, -1))
    # Guard against un-transposed torch weights being passed in.
    assert b1.shape[1] == Hmid, "b1 must have Hmid elems; pass w1 as (in, out)"
    assert w2.shape == (Hmid, H), "w2 must be (Hmid, H); pass w2 as (in, out)"
    assert b2.shape[1] == H, "b2 must have H elems"

    HmidP = _round_up(Hmid, 128)
    w1p = jnp.pad(w1, ((0, 0), (0, HmidP - Hmid)))
    b1p = jnp.pad(b1, ((0, 0), (0, HmidP - Hmid)))
    w2p = jnp.pad(w2, ((0, HmidP - Hmid), (0, 0)))
    b2p = b2
    if compute_dtype is not None:
        w1p, b1p, w2p, b2p = (x.astype(compute_dtype)
                              for x in (w1p, b1p, w2p, b2p))
    return w1p, b1p, w2p, b2p


def ode_func_forward(t_local, y, padded_params, *, ode_type="sta",
                     backwards=False, bm=1024):
    """Pallas equivalent of ODEFunc.forward(t_local, y, backwards).

    inputs_interpolation is None -> t_local is unused.
    `bm` is the requested batch tile (main tuning knob); it is shrunk
    automatically to fit the VMEM budget and split so the grid has >=2 steps.
    """
    del t_local
    w1p, b1p, w2p, b2p = padded_params
    B, H = y.shape
    HmidP = w1p.shape[1]
    assert w1p.shape[0] == H and w2p.shape == (HmidP, H)

    sub = 16 if y.dtype == jnp.bfloat16 else 8
    rows = _round_up(B, sub)
    bm_eff = min(_round_up(bm, sub), rows)
    # v7x has 2 TensorCores: the "parallel" grid axis only shards work if it
    # has >= 2 steps.  Split the batch when it is big enough (harmless on
    # single-TC v5e/v6e: one extra ~0.35us grid step).
    if rows >= 2 * sub and pl.cdiv(B, bm_eff) < 2:
        bm_eff = _round_up(pl.cdiv(B, 2), sub)

    a_bytes = jnp.dtype(y.dtype).itemsize
    w_bytes = jnp.dtype(w1p.dtype).itemsize
    budget = _vmem_budget_bytes()

    def weight_vmem(nbuf):
        return nbuf * (H * HmidP + HmidP * H + HmidP + H) * w_bytes

    def act_vmem(bm_rows):
        io = 2 * 2 * bm_rows * H * a_bytes                 # y + out, double-buffered
        f32_tmp = bm_rows * (HmidP + 2 * H) * 4            # pre-act/h, dy_dt, grad
        return io + f32_tmp

    def build(single_buffer_weights):
        nbuf = 1 if single_buffer_weights else 2
        bm_fit = bm_eff
        # Shrink the batch tile until weights + activations + f32 temps fit.
        while bm_fit > sub and weight_vmem(nbuf) + act_vmem(bm_fit) > budget:
            bm_fit = max(sub, _round_up(bm_fit // 2, sub))
        vmem_limit = int(min(budget,
                             max(16 * 1024 * 1024,
                                 weight_vmem(nbuf) + act_vmem(bm_fit)
                                 + (2 << 20))))

        def resident(shape):
            # Constant index_map -> weights/biases stay resident across the
            # batch grid; single-buffer them when supported (they are never
            # re-fetched, so no pipelining is lost).
            kwargs = ({"pipeline_mode": pl.Buffered(1)}
                      if single_buffer_weights else {})
            return pl.BlockSpec(shape, lambda *_: (0,) * len(shape), **kwargs)

        kernel = functools.partial(_odefunc_kernel, ode_type=ode_type,
                                   backwards=backwards)
        return pl.pallas_call(
            kernel,
            out_shape=jax.ShapeDtypeStruct((B, H), y.dtype),
            grid=(pl.cdiv(B, bm_fit),),
            in_specs=[
                pl.BlockSpec((bm_fit, H), lambda i: (i, 0)),   # y tile (unpadded)
                resident((H, HmidP)),                          # W1
                resident((1, HmidP)),                          # b1
                resident((HmidP, H)),                          # W2
                resident((1, H)),                              # b2
            ],
            out_specs=pl.BlockSpec((bm_fit, H), lambda i: (i, 0)),
            compiler_params=pltpu.CompilerParams(
                dimension_semantics=("parallel",),
                vmem_limit_bytes=vmem_limit),
        )(y, w1p, b1p, w2p, b2p)

    try:
        return build(single_buffer_weights=True)
    except Exception:
        # Fallback for jax versions where pipeline_mode=pl.Buffered(1) on a
        # resident input is not supported: default double-buffered weights.
        return build(single_buffer_weights=False)


def _reference(y, params, ode_type, backwards):
    w1, b1, w2, b2 = params
    h = jnp.tanh(y @ w1 + jnp.reshape(b1, (1, -1)))
    dy_dt = h @ w2 + jnp.reshape(b2, (1, -1))
    if ode_type == "normal":
        grad = dy_dt
    elif ode_type == "sta":
        grad = dy_dt - y
    elif ode_type == "orth":
        grad = dy_dt - (jnp.sum(dy_dt * y, -1, keepdims=True)
                        / jnp.sum(y * y, -1, keepdims=True)) * y
    return -grad if backwards else grad


if __name__ == "__main__":
    B, H, Hmid = 64, 32, 64
    key = jax.random.PRNGKey(0)
    k_y, k_w1, k_b1, k_w2, k_b2 = jax.random.split(key, 5)

    y = jax.random.normal(k_y, (B, H), dtype=jnp.float32)
    # Deterministic synthetic parameters for the gradient MLP.
    w1 = jax.random.normal(k_w1, (H, Hmid), dtype=jnp.float32) * 0.1
    b1 = jax.random.normal(k_b1, (Hmid,), dtype=jnp.float32) * 0.01
    w2 = jax.random.normal(k_w2, (Hmid, H), dtype=jnp.float32) * 0.1
    b2 = jax.random.normal(k_b2, (H,), dtype=jnp.float32) * 0.01
    raw_params = (w1, b1, w2, b2)
    params_f32 = prepare_params(*raw_params)

    t_local = jnp.float32(0.3)  # unused (inputs_interpolation is None)

    ok = True
    # 'orth' uses the EUP approximate reciprocal -> slightly looser tolerance.
    tols = {"normal": 1e-5, "sta": 1e-5, "orth": 5e-3}
    for ode_type, tol in tols.items():
        out = jax.block_until_ready(
            ode_func_forward(t_local, y, params_f32, ode_type=ode_type,
                             backwards=False))
        ref = _reference(y, raw_params, ode_type, backwards=False)
        ok &= bool(jnp.allclose(out, ref, atol=tol, rtol=tol))

    # backwards=True path (gradient negated)
    out_b = jax.block_until_ready(
        ode_func_forward(t_local, y, params_f32, ode_type="sta",
                         backwards=True))
    ok &= bool(jnp.allclose(out_b, _reference(y, raw_params, "sta", True),
                            atol=1e-5, rtol=1e-5))

    # bf16 activations + weights fed straight to the MXU (no f32 upcast of
    # operands; accumulation and elementwise math stay f32).
    params_bf16 = prepare_params(*raw_params, compute_dtype=jnp.bfloat16)
    out_bf = jax.block_until_ready(
        ode_func_forward(t_local, y.astype(jnp.bfloat16), params_bf16,
                         ode_type="sta", backwards=False))
    ok &= bool(jnp.allclose(out_bf.astype(jnp.float32),
                            _reference(y, raw_params, "sta", False),
                            atol=1.5e-1, rtol=1.5e-1))

    if ok:
        print("KERNEL_OK")
    else:
        raise SystemExit("mismatch vs reference")
</pallas_src>

<mosaic_0001>
module attributes {stable_mosaic.version = 11 : i64} {
  func.func @_odefunc_kernel(%arg0: i32, %arg1: memref<32x32xf32, #tpu.memory_space<vmem>>, %arg2: memref<32x128xf32, #tpu.memory_space<vmem>>, %arg3: memref<1x128xf32, #tpu.memory_space<vmem>>, %arg4: memref<128x32xf32, #tpu.memory_space<vmem>>, %arg5: memref<1x32xf32, #tpu.memory_space<vmem>>, %arg6: memref<32x32xf32, #tpu.memory_space<vmem>>) attributes {dimension_semantics = [#tpu.dimension_semantics<parallel>], iteration_bounds = array<i64: 2>, scalar_prefetch = 0 : i64, scratch_operands = 0 : i64, tpu.core_type = #tpu.core_type<tc>, window_params = [{transform_indices = @transform_0, window_bounds = array<i64: 32, 32>}, {pipeline_mode = #tpu.pipeline_mode<synchronous>, transform_indices = @transform_1, window_bounds = array<i64: 32, 128>}, {pipeline_mode = #tpu.pipeline_mode<synchronous>, transform_indices = @transform_2, window_bounds = array<i64: 1, 128>}, {pipeline_mode = #tpu.pipeline_mode<synchronous>, transform_indices = @transform_3, window_bounds = array<i64: 128, 32>}, {pipeline_mode = #tpu.pipeline_mode<synchronous>, transform_indices = @transform_4, window_bounds = array<i64: 1, 32>}, {transform_indices = @transform_5, window_bounds = array<i64: 32, 32>}]} {
    %c0 = arith.constant 0 : index
    %c0_0 = arith.constant 0 : index
    %0 = vector.load %arg1[%c0, %c0_0] : memref<32x32xf32, #tpu.memory_space<vmem>>, vector<32x32xf32>
    %c0_1 = arith.constant 0 : index
    %c0_2 = arith.constant 0 : index
    %1 = vector.load %arg2[%c0_1, %c0_2] : memref<32x128xf32, #tpu.memory_space<vmem>>, vector<32x128xf32>
    %cst = arith.constant dense<0.000000e+00> : vector<32x128xf32>
    %2 = tpu.matmul %0, %1, %cst {dimension_numbers = #tpu.dot_dimension_numbers<[1], [0], [0], [1], [0, 0, 1, 1], [], []>} : vector<32x32xf32>, vector<32x128xf32>, vector<32x128xf32> -> vector<32x128xf32>
    %c0_3 = arith.constant 0 : index
    %c0_4 = arith.constant 0 : index
    %3 = vector.load %arg3[%c0_3, %c0_4] : memref<1x128xf32, #tpu.memory_space<vmem>>, vector<1x128xf32>
    %4 = vector.broadcast %3 : vector<1x128xf32> to vector<32x128xf32>
    %5 = arith.addf %2, %4 : vector<32x128xf32>
    %6 = math.tanh %5 : vector<32x128xf32>
    %c0_5 = arith.constant 0 : index
    %c0_6 = arith.constant 0 : index
    %7 = vector.load %arg4[%c0_5, %c0_6] : memref<128x32xf32, #tpu.memory_space<vmem>>, vector<128x32xf32>
    %cst_7 = arith.constant dense<0.000000e+00> : vector<32x32xf32>
    %8 = tpu.matmul %6, %7, %cst_7 {dimension_numbers = #tpu.dot_dimension_numbers<[1], [0], [0], [1], [0, 0, 1, 1], [], []>} : vector<32x128xf32>, vector<128x32xf32>, vector<32x32xf32> -> vector<32x32xf32>
    %c0_8 = arith.constant 0 : index
    %c0_9 = arith.constant 0 : index
    %9 = vector.load %arg5[%c0_8, %c0_9] : memref<1x32xf32, #tpu.memory_space<vmem>>, vector<1x32xf32>
    %10 = vector.broadcast %9 : vector<1x32xf32> to vector<32x32xf32>
    %11 = arith.addf %8, %10 : vector<32x32xf32>
    %c0_10 = arith.constant 0 : index
    %c0_11 = arith.constant 0 : index
    %12 = vector.load %arg6[%c0_10, %c0_11] : memref<32x32xf32, #tpu.memory_space<vmem>>, vector<32x32xf32>
    tpu.vector_store %arg6[%c0_10, %c0_11], %11 {strides = array<i32>} : memref<32x32xf32, #tpu.memory_space<vmem>>, vector<32x32xf32>,
    return
  }
  func.func @transform_0(%arg0: i32) -> (i32, i32) {
    %c0_i32 = arith.constant 0 : i32
    %c0_i32_0 = arith.constant 0 : i32
    return %arg0, %c0_i32 : i32, i32
  }
  func.func @transform_1(%arg0: i32) -> (i32, i32) {
    %c0_i32 = arith.constant 0 : i32
    %c0_i32_0 = arith.constant 0 : i32
    %c0_i32_1 = arith.constant 0 : i32
    return %c0_i32, %c0_i32_0 : i32, i32
  }
  func.func @transform_2(%arg0: i32) -> (i32, i32) {
    %c0_i32 = arith.constant 0 : i32
    %c0_i32_0 = arith.constant 0 : i32
    %c0_i32_1 = arith.constant 0 : i32
    return %c0_i32, %c0_i32_0 : i32, i32
  }
  func.func @transform_3(%arg0: i32) -> (i32, i32) {
    %c0_i32 = arith.constant 0 : i32
    %c0_i32_0 = arith.constant 0 : i32
    %c0_i32_1 = arith.constant 0 : i32
    return %c0_i32, %c0_i32_0 : i32, i32
  }
  func.func @transform_4(%arg0: i32) -> (i32, i32) {
    %c0_i32 = arith.constant 0 : i32
    %c0_i32_0 = arith.constant 0 : i32
    %c0_i32_1 = arith.constant 0 : i32
    return %c0_i32, %c0_i32_0 : i32, i32
  }
  func.func @transform_5(%arg0: i32) -> (i32, i32) {
    %c0_i32 = arith.constant 0 : i32
    %c0_i32_0 = arith.constant 0 : i32
    return %arg0, %c0_i32 : i32, i32
  }
}

module attributes {stable_mosaic.version = 11 : i64} {
  func.func @_odefunc_kernel(%arg0: i32, %arg1: memref<32x32xf32, #tpu.memory_space<vmem>>, %arg2: memref<32x128xf32, #tpu.memory_space<vmem>>, %arg3: memref<1x128xf32, #tpu.memory_space<vmem>>, %arg4: memref<128x32xf32, #tpu.memory_space<vmem>>, %arg5: memref<1x32xf32, #tpu.memory_space<vmem>>, %arg6: memref<32x32xf32, #tpu.memory_space<vmem>>) attributes {dimension_semantics = [#tpu.dimension_semantics<parallel>], iteration_bounds = array<i64: 2>, scalar_prefetch = 0 : i64, scratch_operands = 0 : i64, tpu.core_type = #tpu.core_type<tc>, window_params = [{transform_indices = @transform_0, window_bounds = array<i64: 32, 32>}, {pipeline_mode = #tpu.pipeline_mode<synchronous>, transform_indices = @transform_1, window_bounds = array<i64: 32, 128>}, {pipeline_mode = #tpu.pipeline_mode<synchronous>, transform_indices = @transform_2, window_bounds = array<i64: 1, 128>}, {pipeline_mode = #tpu.pipeline_mode<synchronous>, transform_indices = @transform_3, window_bounds = array<i64: 128, 32>}, {pipeline_mode = #tpu.pipeline_mode<synchronous>, transform_indices = @transform_4, window_bounds = array<i64: 1, 32>}, {transform_indices = @transform_5, window_bounds = array<i64: 32, 32>}]} {
    %c0 = arith.constant 0 : index
    %c0_0 = arith.constant 0 : index
    %0 = vector.load %arg1[%c0, %c0_0] : memref<32x32xf32, #tpu.memory_space<vmem>>, vector<32x32xf32>
    %c0_1 = arith.constant 0 : index
    %c0_2 = arith.constant 0 : index
    %1 = vector.load %arg2[%c0_1, %c0_2] : memref<32x128xf32, #tpu.memory_space<vmem>>, vector<32x128xf32>
    %cst = arith.constant dense<0.000000e+00> : vector<32x128xf32>
    %2 = tpu.matmul %0, %1, %cst {dimension_numbers = #tpu.dot_dimension_numbers<[1], [0], [0], [1], [0, 0, 1, 1], [], []>} : vector<32x32xf32>, vector<32x128xf32>, vector<32x128xf32> -> vector<32x128xf32>
    %c0_3 = arith.constant 0 : index
    %c0_4 = arith.constant 0 : index
    %3 = vector.load %arg3[%c0_3, %c0_4] : memref<1x128xf32, #tpu.memory_space<vmem>>, vector<1x128xf32>
    %4 = vector.broadcast %3 : vector<1x128xf32> to vector<32x128xf32>
    %5 = arith.addf %2, %4 : vector<32x128xf32>
    %6 = math.tanh %5 : vector<32x128xf32>
    %c0_5 = arith.constant 0 : index
    %c0_6 = arith.constant 0 : index
    %7 = vector.load %arg4[%c0_5, %c0_6] : memref<128x32xf32, #tpu.memory_space<vmem>>, vector<128x32xf32>
    %cst_7 = arith.constant dense<0.000000e+00> : vector<32x32xf32>
    %8 = tpu.matmul %6, %7, %cst_7 {dimension_numbers = #tpu.dot_dimension_numbers<[1], [0], [0], [1], [0, 0, 1, 1], [], []>} : vector<32x128xf32>, vector<128x32xf32>, vector<32x32xf32> -> vector<32x32xf32>
    %c0_8 = arith.constant 0 : index
    %c0_9 = arith.constant 0 : index
    %9 = vector.load %arg5[%c0_8, %c0_9] : memref<1x32xf32, #tpu.memory_space<vmem>>, vector<1x32xf32>
    %10 = vector.broadcast %9 : vector<1x32xf32> to vector<32x32xf32>
    %11 = arith.addf %8, %10 : vector<32x32xf32>
    %c0_10 = arith.constant 0 : index
    %c0_11 = arith.constant 0 : index
    %12 = vector.load %arg6[%c0_10, %c0_11] : memref<32x32xf32, #tpu.memory_space<vmem>>, vector<32x32xf32>
    tpu.vector_store %arg6[%c0_10, %c0_11], %11 {strides = array<i32>} : memref<32x32xf32, #tpu.memory_space<vmem>>, vector<32x32xf32>,
    return
  }
  func.func @transform_0(%arg0: i32) -> (i32, i32) {
    %c0_i32 = arith.constant 0 : i32
    %c0_i32_0 = arith.constant 0 : i32
    return %arg0, %c0_i32 : i32, i32
  }
  func.func @transform_1(%arg0: i32) -> (i32, i32) {
    %c0_i32 = arith.constant 0 : i32
    %c0_i32_0 = arith.constant 0 : i32
    %c0_i32_1 = arith.constant 0 : i32
    return %c0_i32, %c0_i32_0 : i32, i32
  }
  func.func @transform_2(%arg0: i32) -> (i32, i32) {
    %c0_i32 = arith.constant 0 : i32
    %c0_i32_0 = arith.constant 0 : i32
    %c0_i32_1 = arith.constant 0 : i32
    return %c0_i32, %c0_i32_0 : i32, i32
  }
  func.func @transform_3(%arg0: i32) -> (i32, i32) {
    %c0_i32 = arith.constant 0 : i32
    %c0_i32_0 = arith.constant 0 : i32
    %c0_i32_1 = arith.constant 0 : i32
    return %c0_i32, %c0_i32_0 : i32, i32
  }
  func.func @transform_4(%arg0: i32) -> (i32, i32) {
    %c0_i32 = arith.constant 0 : i32
    %c0_i32_0 = arith.constant 0 : i32
    %c0_i32_1 = arith.constant 0 : i32
    return %c0_i32, %c0_i32_0 : i32, i32
  }
  func.func @transform_5(%arg0: i32) -> (i32, i32) {
    %c0_i32 = arith.constant 0 : i32
    %c0_i32_0 = arith.constant 0 : i32
    return %arg0, %c0_i32 : i32, i32
  }
}

</mosaic_0001>

<llo_original>
// kernel: tpu_custom_call.1
$region0: #{tpu_custom_call.1}
  #allocation0 [shape = 'u32[]', space=smem, size = 0x4, offset = 0x4, fixed_abs, tag = 'smem constant byte address 0x4 - core index']
  #allocation1 [shape = 'u32[144,128]{1,0:T(1,128)}', space=vmem, size = 0x12000, scoped, tag = 'internal scratch']
  %s0 = inlined_call_operand.vmem [shape: f32[64,32], index: 0, kind: input, shape index: {}]
  %s1 = inlined_call_operand.vmem [shape: f32[32,128], index: 1, kind: input, shape index: {}]
  %s2 = inlined_call_operand.vmem [shape: f32[1,128], index: 2, kind: input, shape index: {}]
  %s3 = inlined_call_operand.vmem [shape: f32[128,32], index: 3, kind: input, shape index: {}]
  %s4 = inlined_call_operand.vmem [shape: f32[1,32], index: 4, kind: input, shape index: {}]
  %s5 = inlined_call_operand.vmem [shape: f32[64,32], index: 5, kind: output, shape index: {}]
  %s6 = sld [smem:[#allocation0]]
  $region53: #{tpu_custom_call.1} parent=0
    _
  %s8 = ssub.s32 1, %s6
  %s9 = scalar_select 0, %s8, %s6
  loop: start=0, step=1, limit=4
  $region2: #{tpu_custom_call.1} parent=0 // loop_pre_header
    _
  $region3: #{tpu_custom_call.1} parent=0 // loop_header
    %s11 = sphi 0, %s15
    %p12 = scmp.ge.s32.totalorder %s11, 4
    %s21 = sphi 0, %s23
    %s24 = sphi 0, %s21
    %s25 = sphi 0, %s24
    %s41 = sphi 0, %s25
    %s45 = sphi 0, %s45
    %s47 = sphi 0, %s45
    %s48 = sphi 0, %s47
    %s62 = sphi 0, %s48
    %s66 = sphi 0, %s66
    %s68 = sphi 0, %s66
    %s69 = sphi 0, %s68
    %s83 = sphi 0, %s69
    %s87 = sphi 0, %s87
    %s89 = sphi 0, %s87
    %s90 = sphi 0, %s89
    %s104 = sphi 0, %s90
    %s108 = sphi 0, %s108
    %s110 = sphi 0, %s108
    %s111 = sphi 0, %s110
    %s125 = sphi 0, %s111
    %s131 = sphi 0, %s133
    %s134 = sphi 0, %s131
    %s135 = sphi 0, %s134
    %s151 = sphi 0, %s135
  $region4: #{tpu_custom_call.1} parent=0 // loop_header_branch
    %14 = sbr.rel (%p12) target = $region8
  $region5: #{tpu_custom_call.1} parent=0 // loop_body
    %s16 = ssub.s32 %s11, 1
    %s17 = ssub.s32 %s11, 2
    %s18 = sadd.s32 %s11, 1
    %s19 = ssub.s32 %s11, %s18
    %p20 = scmp.eq.s32.totalorder %s19, 0
    %s22 = sadd.s32 %s21, 1
    %s23 = scalar_select %p20, %s21, %s22
    %p26 = pneg %p20
    %p27 = scmp.eq.s32.totalorder %s11, 1
    %p28 = por %p26, %p27
    %p29 = scmp.ne.s32.totalorder %s21, %s24
    %p30 = scmp.eq.s32.totalorder %s11, 0
    %p31 = por %p29, %p30
    %p32 = scmp.ne.s32.totalorder %s21, %s24
    %p33 = scmp.eq.s32.totalorder %s16, 1
    %p34 = por %p32, %p33
    %p35 = scmp.ne.s32.totalorder %s24, %s25
    %p36 = scmp.eq.s32.totalorder %s16, 0
    %p37 = por %p35, %p36
    %p38 = scmp.ne.s32.totalorder %s24, %s25
    %p39 = scmp.eq.s32.totalorder %s17, 1
    %p40 = por %p38, %p39
    %p42 = scmp.ne.s32.totalorder %s25, %s41
    %p43 = scmp.eq.s32.totalorder %s17, 0
    %p44 = por %p42, %p43
    %s46 = sadd.s32 %s45, 1
    %p49 = scmp.eq.s32.totalorder %s11, 1
    %p50 = scmp.ne.s32.totalorder %s45, %s47
    %p51 = scmp.eq.s32.totalorder %s11, 0
    %p52 = por %p50, %p51
    %p53 = scmp.ne.s32.totalorder %s45, %s47
    %p54 = scmp.eq.s32.totalorder %s16, 1
    %p55 = por %p53, %p54
    %p56 = scmp.ne.s32.totalorder %s47, %s48
    %p57 = scmp.eq.s32.totalorder %s16, 0
    %p58 = por %p56, %p57
    %p59 = scmp.ne.s32.totalorder %s47, %s48
    %p60 = scmp.eq.s32.totalorder %s17, 1
    %p61 = por %p59, %p60
    %p63 = scmp.ne.s32.totalorder %s48, %s62
    %p64 = scmp.eq.s32.totalorder %s17, 0
    %p65 = por %p63, %p64
    %s67 = sadd.s32 %s66, 1
    %p70 = scmp.eq.s32.totalorder %s11, 1
    %p71 = scmp.ne.s32.totalorder %s66, %s68
    %p72 = scmp.eq.s32.totalorder %s11, 0
    %p73 = por %p71, %p72
    %p74 = scmp.ne.s32.totalorder %s66, %s68
    %p75 = scmp.eq.s32.totalorder %s16, 1
    %p76 = por %p74, %p75
    %p77 = scmp.ne.s32.totalorder %s68, %s69
    %p78 = scmp.eq.s32.totalorder %s16, 0
    %p79 = por %p77, %p78
    %p80 = scmp.ne.s32.totalorder %s68, %s69
    %p81 = scmp.eq.s32.totalorder %s17, 1
    %p82 = por %p80, %p81
    %p84 = scmp.ne.s32.totalorder %s69, %s83
    %p85 = scmp.eq.s32.totalorder %s17, 0
    %p86 = por %p84, %p85
    %s88 = sadd.s32 %s87, 1
    %p91 = scmp.eq.s32.totalorder %s11, 1
    %p92 = scmp.ne.s32.totalorder %s87, %s89
    %p93 = scmp.eq.s32.totalorder %s11, 0
    %p94 = por %p92, %p93
    %p95 = scmp.ne.s32.totalorder %s87, %s89
    %p96 = scmp.eq.s32.totalorder %s16, 1
    %p97 = por %p95, %p96
    %p98 = scmp.ne.s32.totalorder %s89, %s90
    %p99 = scmp.eq.s32.totalorder %s16, 0
    %p100 = por %p98, %p99
    %p101 = scmp.ne.s32.totalorder %s89, %s90
    %p102 = scmp.eq.s32.totalorder %s17, 1
    %p103 = por %p101, %p102
    %p105 = scmp.ne.s32.totalorder %s90, %s104
    %p106 = scmp.eq.s32.totalorder %s17, 0
    %p107 = por %p105, %p106
    %s109 = sadd.s32 %s108, 1
    %p112 = scmp.eq.s32.totalorder %s11, 1
    %p113 = scmp.ne.s32.totalorder %s108, %s110
    %p114 = scmp.eq.s32.totalorder %s11, 0
    %p115 = por %p113, %p114
    %p116 = scmp.ne.s32.totalorder %s108, %s110
    %p117 = scmp.eq.s32.totalorder %s16, 1
    %p118 = por %p116, %p117
    %p119 = scmp.ne.s32.totalorder %s110, %s111
    %p120 = scmp.eq.s32.totalorder %s16, 0
    %p121 = por %p119, %p120
    %p122 = scmp.ne.s32.totalorder %s110, %s111
    %p123 = scmp.eq.s32.totalorder %s17, 1
    %p124 = por %p122, %p123
    %p126 = scmp.ne.s32.totalorder %s111, %s125
    %p127 = scmp.eq.s32.totalorder %s17, 0
    %p128 = por %p126, %p127
    %s129 = ssub.s32 %s11, %s18
    %p130 = scmp.eq.s32.totalorder %s129, 0
    %s132 = sadd.s32 %s131, 1
    %s133 = scalar_select %p130, %s131, %s132
    %p136 = pneg %p130
    %p137 = scmp.eq.s32.totalorder %s11, 1
    %p138 = por %p136, %p137
    %p139 = scmp.ne.s32.totalorder %s131, %s134
    %p140 = scmp.eq.s32.totalorder %s11, 0
    %p141 = por %p139, %p140
    %p142 = scmp.ne.s32.totalorder %s131, %s134
    %p143 = scmp.eq.s32.totalorder %s16, 1
    %p144 = por %p142, %p143
    %p145 = scmp.ne.s32.totalorder %s134, %s135
    %p146 = scmp.eq.s32.totalorder %s16, 0
    %p147 = por %p145, %p146
    %p148 = scmp.ne.s32.totalorder %s134, %s135
    %p149 = scmp.eq.s32.totalorder %s17, 1
    %p150 = por %p148, %p149
    %p152 = scmp.ne.s32.totalorder %s135, %s151
    %p153 = scmp.eq.s32.totalorder %s17, 0
    %p154 = por %p152, %p153
    %p155 = scmp.le.s32.totalorder 1, %s11
    %p156 = scmp.lt.s32.totalorder %s11, 3
    %p157 = pnand %p155, %p156
    %p158 = pneg %p157
    // Predicated region
    $region9: #{tpu_custom_call.1} parent=5 // pred_check
      _
    $region10: #{tpu_custom_call.1} parent=5 // pred_check_branch
      %160 = sbr.rel (%p157) target = $region12
    $region11: #{tpu_custom_call.1} parent=5 // pred_region
      %s161 = ssub.s32 %s11, 1
      // Predicated region
      $region13: #{tpu_custom_call.1} parent=11 // pred_check
        %p162 = pneg %p58
      $region14: #{tpu_custom_call.1} parent=11 // pred_check_branch
        %164 = sbr.rel (%p162) target = $region16
      $region15: #{tpu_custom_call.1} parent=11 // pred_region
        _
      $region16: #{tpu_custom_call.1} parent=11 // pred_fallthru
        _
      // Predicated region
      $region17: #{tpu_custom_call.1} parent=11 // pred_check
        %p165 = pneg %p79
      $region18: #{tpu_custom_call.1} parent=11 // pred_check_branch
        %167 = sbr.rel (%p165) target = $region20
      $region19: #{tpu_custom_call.1} parent=11 // pred_region
        _
      $region20: #{tpu_custom_call.1} parent=11 // pred_fallthru
        _
      // Predicated region
      $region21: #{tpu_custom_call.1} parent=11 // pred_check
        %p168 = pneg %p100
      $region22: #{tpu_custom_call.1} parent=11 // pred_check_branch
        %170 = sbr.rel (%p168) target = $region24
      $region23: #{tpu_custom_call.1} parent=11 // pred_region
        _
      $region24: #{tpu_custom_call.1} parent=11 // pred_fallthru
        _
      // Predicated region
      $region25: #{tpu_custom_call.1} parent=11 // pred_check
        %p171 = pneg %p121
      $region26: #{tpu_custom_call.1} parent=11 // pred_check_branch
        %173 = sbr.rel (%p171) target = $region28
      $region27: #{tpu_custom_call.1} parent=11 // pred_region
        _
      $region28: #{tpu_custom_call.1} parent=11 // pred_fallthru
        _
    $region12: #{tpu_custom_call.1} parent=5 // pred_fallthru
      _
    %p174 = scmp.lt.s32.totalorder %s11, 2
    // Predicated region
    $region29: #{tpu_custom_call.1} parent=5 // pred_check
      %p175 = pneg %p174
    $region30: #{tpu_custom_call.1} parent=5 // pred_check_branch
      %177 = sbr.rel (%p175) target = $region32
    $region31: #{tpu_custom_call.1} parent=5 // pred_region
      // Predicated region
      $region33: #{tpu_custom_call.1} parent=31 // pred_check
        %p178 = pneg %p31
      $region34: #{tpu_custom_call.1} parent=31 // pred_check_branch
        %180 = sbr.rel (%p178) target = $region36
      $region35: #{tpu_custom_call.1} parent=31 // pred_region
        %s181 = smul.u32 4, %s11
        %p182 = scmp.lt.s32.totalorder %s181, 7
        %s183 = scalar_select %p182, %s181, 7
        %s184 = smul.addr %s183, 8
        %s185 = scalar_lea.vmem %s0, %s184
        %s186 = smul.u32 4, %s11
      $region36: #{tpu_custom_call.1} parent=31 // pred_fallthru
        _
    $region32: #{tpu_custom_call.1} parent=5 // pred_fallthru
      _
    %p187 = scmp.le.s32.totalorder 1, %s11
    %p188 = scmp.lt.s32.totalorder %s11, 3
    %p189 = pnand %p187, %p188
    %p190 = pneg %p189
    // Predicated region
    $region37: #{tpu_custom_call.1} parent=5 // pred_check
      _
    $region38: #{tpu_custom_call.1} parent=5 // pred_check_branch
      %192 = sbr.rel (%p189) target = $region40
    $region39: #{tpu_custom_call.1} parent=5 // pred_region
      %s193 = ssub.s32 %s11, 1
      %s194 = smul.u32 4, %s16
      %p195 = scmp.lt.s32.totalorder %s194, 7
      %s196 = scalar_select %p195, %s194, 7
      %s197 = smul.addr %s196, 8
      %s198 = scalar_lea.vmem %s0, %s197
      %p199 = pneg %p37
      %p200 = pneg %p34
      %p201 = pneg %p58
      %p202 = pneg %p55
      %p203 = pneg %p79
      %p204 = pneg %p76
      %p205 = pneg %p100
      %p206 = pneg %p97
      %p207 = pneg %p121
      %p208 = pneg %p118
      %p209 = pneg %p147
      %p210 = pneg %p144
      %s211 = smul.u32 4, %s16
      %p212 = scmp.lt.s32.totalorder %s211, 7
      %s213 = scalar_select %p212, %s211, 7
      %s214 = smul.addr %s213, 8
      %s215 = scalar_lea.vmem %s5, %s214
      %s216 = smul.u32 4, %s16
      %p217 = scmp.lt.s32.totalorder %s216, 7
      %s218 = scalar_select %p217, %s216, 7
      %s219 = smul.addr %s218, 8
      %s220 = scalar_lea.vmem %s0, %s219
      %s221 = smul.u32 4, %s16
      %s222 = smul.u32 4, %s16
      %p223 = scmp.lt.s32.totalorder %s222, 7
      %s224 = scalar_select %p223, %s222, 7
      %s225 = smul.addr %s224, 8
      %s226 = scalar_lea.vmem %s5, %s225
      %s227 = smul.u32 4, %s16
      %v228 = vld [vmem:[%s220] sm:$0xff]
      %v229 = vld [vmem:[%s220 + $0x8] sm:$0xff]
      %v230 = vld [vmem:[%s220 + $0x10] sm:$0xff]
      %v231 = vld [vmem:[%s220 + $0x18] sm:$0xff]
      %v232 = vld [vmem:[%s1] sm:$0xff]
      %v233 = vld [vmem:[%s1 + $0x8] sm:$0xff]
      %v234 = vld [vmem:[%s1 + $0x10] sm:$0xff]
      %v235 = vld [vmem:[%s1 + $0x18] sm:$0xff]
      %v236 = vld [vmem:[%s2] sm:$0x1]
      %v238 = vlaneseq
      %v239 = vshrl.u32 %v238, 7
      %v240 = vsub.s32 0, %v239
      %v241 = vrot.slane %v236, %v240
      %vm243 = vcmask 261120
      %v245 = vsel %vm243, %v228, 0
      %v248 = vsel %vm243, %v229, 0
      %v251 = vsel %vm243, %v230, 0
      %v254 = vsel %vm243, %v231, 0
      %256 = vmatprep.subr.mxu0 0.0
      %257 = vmatpush1.msra.mxu0 0.0
      %258 = vmatprep.subr.mxu0 0.0
      %259 = vmatpush1.msra.mxu0 0.0
      %260 = vmatprep.subr.mxu0 0.0
      %261 = vmatpush1.msra.mxu0 0.0
      %262 = vmatprep.subr.mxu0 0.0
      %263 = vmatpush1.msra.mxu0 0.0
      %264 = vmatprep.subr.mxu0 0.0
      %265 = vmatpush1.msra.mxu0 0.0
      %266 = vmatprep.subr.mxu0 0.0
      %267 = vmatpush1.msra.mxu0 0.0
      %268 = vmatprep.subr.mxu0 0.0
      %269 = vmatpush1.msra.mxu0 0.0
      %270 = vmatprep.subr.mxu0 0.0
      %271 = vmatpush1.msra.mxu0 0.0
      %272 = vmatprep.subr.mxu0 0.0
      %273 = vmatpush1.msra.mxu0 0.0
      %274 = vmatprep.subr.mxu0 0.0
      %275 = vmatpush1.msra.mxu0 0.0
      %276 = vmatprep.subr.mxu0 0.0
      %277 = vmatpush1.msra.mxu0 0.0
      %278 = vmatprep.subr.mxu0 0.0
      %279 = vmatpush1.msra.mxu0 0.0
      %280 = vmatprep.subr.mxu0 0.0
      %281 = vmatpush1.msra.mxu0 %v235
      %282 = vmatprep.subr.mxu0 0.0
      %283 = vmatpush1.msra.mxu0 %v234
      %284 = vmatprep.subr.mxu0 0.0
      %285 = vmatpush1.msra.mxu0 %v233
      %286 = vmatprep.subr.mxu0 0.0
      %287 = vmatpush1.msra.mxu0 %v232
      %288 = vmatprep.subr.mxu0 0.0
      %289 = vmatpush2.msra.mxu0 0.0
      %290 = vmatprep.subr.mxu0 0.0
      %291 = vmatpush2.msra.mxu0 0.0
      %292 = vmatprep.subr.mxu0 0.0
      %293 = vmatpush2.msra.mxu0 0.0
      %294 = vmatprep.subr.mxu0 0.0
      %295 = vmatpush2.msra.mxu0 0.0
      %296 = vmatprep.subr.mxu0 0.0
      %297 = vmatpush2.msra.mxu0 0.0
      %298 = vmatprep.subr.mxu0 0.0
      %299 = vmatpush2.msra.mxu0 0.0
      %300 = vmatprep.subr.mxu0 0.0
      %301 = vmatpush2.msra.mxu0 0.0
      %302 = vmatprep.subr.mxu0 0.0
      %303 = vmatpush2.msra.mxu0 0.0
      %304 = vmatprep.subr.mxu0 0.0
      %305 = vmatpush2.msra.mxu0 0.0
      %306 = vmatprep.subr.mxu0 0.0
      %307 = vmatpush2.msra.mxu0 0.0
      %308 = vmatprep.subr.mxu0 0.0
      %309 = vmatpush2.msra.mxu0 0.0
      %310 = vmatprep.subr.mxu0 0.0
      %311 = vmatpush2.msra.mxu0 0.0
      %312 = vmatprep.subr.mxu0 0.0
      %313 = vmatpush2.msra.mxu0 0.0
      %314 = vmatprep.subr.mxu0 0.0
      %315 = vmatpush2.msra.mxu0 0.0
      %316 = vmatprep.subr.mxu0 0.0
      %317 = vmatpush2.msra.mxu0 0.0
      %318 = vmatprep.subr.mxu0 0.0
      %319 = vmatpush2.msra.mxu0 0.0
      %320 = vmatprep.mubr.f32.mxu0 0.0
      %321 = vmatmul.mubr.f32.gmra.mxu0 %v245
      %v322 = vpop.f32.mrf.mxu0
      %v323 = vadd.f32 %v241, %v322
      %v324 = vpop.f32.mrf.mxu0
      %325 = vmatprep.mubr.f32.mxu0 0.0
      %326 = vmatmul.mubr.f32.gmra.mxu0 %v248
      %v327 = vpop.f32.mrf.mxu0
      %v328 = vadd.f32 %v241, %v327
      %v329 = vpop.f32.mrf.mxu0
      %330 = vmatprep.mubr.f32.mxu0 0.0
      %331 = vmatmul.mubr.f32.gmra.mxu0 %v251
      %v332 = vpop.f32.mrf.mxu0
      %v333 = vadd.f32 %v241, %v332
      %v334 = vpop.f32.mrf.mxu0
      %335 = vmatprep.mubr.f32.mxu0 0.0
      %336 = vmatmul.mubr.f32.gmra.mxu0 %v254
      %v337 = vpop.f32.mrf.mxu0
      %v338 = vadd.f32 %v241, %v337
      %v339 = vpop.f32.mrf.mxu0
      %340 = vdwg.mxu0
      %v341 = vtanh.pop %v323
      %v342 = vtanh.pop %v328
      %v343 = vtanh.pop %v333
      %v344 = vtanh.pop %v338
      %v345 = vld [vmem:[%s3] sm:$0xff]
      %v346 = vld [vmem:[%s3 + $0x8] sm:$0xff]
      %v347 = vld [vmem:[%s3 + $0x10] sm:$0xff]
      %v348 = vld [vmem:[%s3 + $0x18] sm:$0xff]
      %v349 = vld [vmem:[%s3 + $0x20] sm:$0xff]
      %v350 = vld [vmem:[%s3 + $0x28] sm:$0xff]
      %v351 = vld [vmem:[%s3 + $0x30] sm:$0xff]
      %v352 = vld [vmem:[%s3 + $0x38] sm:$0xff]
      %v353 = vld [vmem:[%s3 + $0x40] sm:$0xff]
      %v354 = vld [vmem:[%s3 + $0x48] sm:$0xff]
      %v355 = vld [vmem:[%s3 + $0x50] sm:$0xff]
      %v356 = vld [vmem:[%s3 + $0x58] sm:$0xff]
      %v357 = vld [vmem:[%s3 + $0x60] sm:$0xff]
      %v358 = vld [vmem:[%s3 + $0x68] sm:$0xff]
      %v359 = vld [vmem:[%s3 + $0x70] sm:$0xff]
      %v360 = vld [vmem:[%s3 + $0x78] sm:$0xff]
      %v361 = vld [vmem:[%s4] sm:$0x1]
      %v363 = vlaneseq
      %v364 = vshrl.u32 %v363, 7
      %v365 = vsub.s32 0, %v364
      %v366 = vrot.slane %v361, %v365
      %368 = vmatprep.subr.mxu0 0.0
      %369 = vmatpush1.msra.mxu0 %v360
      %370 = vmatprep.subr.mxu0 0.0
      %371 = vmatpush1.msra.mxu0 %v359
      %372 = vmatprep.subr.mxu0 0.0
      %373 = vmatpush1.msra.mxu0 %v358
      %374 = vmatprep.subr.mxu0 0.0
      %375 = vmatpush1.msra.mxu0 %v357
      %376 = vmatprep.subr.mxu0 0.0
      %377 = vmatpush1.msra.mxu0 %v356
      %378 = vmatprep.subr.mxu0 0.0
      %379 = vmatpush1.msra.mxu0 %v355
      %380 = vmatprep.subr.mxu0 0.0
      %381 = vmatpush1.msra.mxu0 %v354
      %382 = vmatprep.subr.mxu0 0.0
      %383 = vmatpush1.msra.mxu0 %v353
      %384 = vmatprep.subr.mxu0 0.0
      %385 = vmatpush1.msra.mxu0 %v352
      %386 = vmatprep.subr.mxu0 0.0
      %387 = vmatpush1.msra.mxu0 %v351
      %388 = vmatprep.subr.mxu0 0.0
      %389 = vmatpush1.msra.mxu0 %v350
      %390 = vmatprep.subr.mxu0 0.0
      %391 = vmatpush1.msra.mxu0 %v349
      %392 = vmatprep.subr.mxu0 0.0
      %393 = vmatpush1.msra.mxu0 %v348
      %394 = vmatprep.subr.mxu0 0.0
      %395 = vmatpush1.msra.mxu0 %v347
      %396 = vmatprep.subr.mxu0 0.0
      %397 = vmatpush1.msra.mxu0 %v346
      %398 = vmatprep.subr.mxu0 0.0
      %399 = vmatpush1.msra.mxu0 %v345
      %400 = vmatprep.subr.mxu0 0.0
      %401 = vmatpush2.msra.mxu0 0.0
      %402 = vmatprep.subr.mxu0 0.0
      %403 = vmatpush2.msra.mxu0 0.0
      %404 = vmatprep.subr.mxu0 0.0
      %405 = vmatpush2.msra.mxu0 0.0
      %406 = vmatprep.subr.mxu0 0.0
      %407 = vmatpush2.msra.mxu0 0.0
      %408 = vmatprep.subr.mxu0 0.0
      %409 = vmatpush2.msra.mxu0 0.0
      %410 = vmatprep.subr.mxu0 0.0
      %411 = vmatpush2.msra.mxu0 0.0
      %412 = vmatprep.subr.mxu0 0.0
      %413 = vmatpush2.msra.mxu0 0.0
      %414 = vmatprep.subr.mxu0 0.0
      %415 = vmatpush2.msra.mxu0 0.0
      %416 = vmatprep.subr.mxu0 0.0
      %417 = vmatpush2.msra.mxu0 0.0
      %418 = vmatprep.subr.mxu0 0.0
      %419 = vmatpush2.msra.mxu0 0.0
      %420 = vmatprep.subr.mxu0 0.0
      %421 = vmatpush2.msra.mxu0 0.0
      %422 = vmatprep.subr.mxu0 0.0
      %423 = vmatpush2.msra.mxu0 0.0
      %424 = vmatprep.subr.mxu0 0.0
      %425 = vmatpush2.msra.mxu0 0.0
      %426 = vmatprep.subr.mxu0 0.0
      %427 = vmatpush2.msra.mxu0 0.0
      %428 = vmatprep.subr.mxu0 0.0
      %429 = vmatpush2.msra.mxu0 0.0
      %430 = vmatprep.subr.mxu0 0.0
      %431 = vmatpush2.msra.mxu0 0.0
      %432 = vmatprep.mubr.f32.mxu0 0.0
      %433 = vmatmul.mubr.f32.gmra.mxu0 %v341
      %v434 = vpop.f32.mrf.mxu0
      %v435 = vadd.f32 %v366, %v434
      %v436 = vpop.f32.mrf.mxu0
      %437 = vmatprep.mubr.f32.mxu0 0.0
      %438 = vmatmul.mubr.f32.gmra.mxu0 %v342
      %v439 = vpop.f32.mrf.mxu0
      %v440 = vadd.f32 %v366, %v439
      %v441 = vpop.f32.mrf.mxu0
      %442 = vmatprep.mubr.f32.mxu0 0.0
      %443 = vmatmul.mubr.f32.gmra.mxu0 %v343
      %v444 = vpop.f32.mrf.mxu0
      %v445 = vadd.f32 %v366, %v444
      %v446 = vpop.f32.mrf.mxu0
      %447 = vmatprep.mubr.f32.mxu0 0.0
      %448 = vmatmul.mubr.f32.gmra.mxu0 %v344
      %v449 = vpop.f32.mrf.mxu0
      %v450 = vadd.f32 %v366, %v449
      %v451 = vpop.f32.mrf.mxu0
      %452 = vdwg.mxu0
      %453 = vst.msk [vmem:[%s226] sm:$0xff] %vm243, %v435
      %454 = vst.msk [vmem:[%s226 + $0x8] sm:$0xff] %vm243, %v440
      %455 = vst.msk [vmem:[%s226 + $0x10] sm:$0xff] %vm243, %v445
      %456 = vst.msk [vmem:[%s226 + $0x18] sm:$0xff] %vm243, %v450
      %s457 = smul.u32 4, %s16
      %p458 = scmp.lt.s32.totalorder %s457, 7
      %s459 = scalar_select %p458, %s457, 7
      %s460 = smul.addr %s459, 8
      %s461 = scalar_lea.vmem %s5, %s460
      // Predicated region
      $region41: #{tpu_custom_call.1} parent=39 // pred_check
        %p462 = pneg %p144
      $region42: #{tpu_custom_call.1} parent=39 // pred_check_branch
        %464 = sbr.rel (%p462) target = $region44
      $region43: #{tpu_custom_call.1} parent=39 // pred_region
        %s465 = smul.u32 4, %s16
      $region44: #{tpu_custom_call.1} parent=39 // pred_fallthru
        _
    $region40: #{tpu_custom_call.1} parent=5 // pred_fallthru
      _
    %p466 = scmp.le.s32.totalorder 2, %s11
    // Predicated region
    $region45: #{tpu_custom_call.1} parent=5 // pred_check
      %p467 = pneg %p466
    $region46: #{tpu_custom_call.1} parent=5 // pred_check_branch
      %469 = sbr.rel (%p467) target = $region48
    $region47: #{tpu_custom_call.1} parent=5 // pred_region
      %s470 = ssub.s32 %s11, 2
      // Predicated region
      $region49: #{tpu_custom_call.1} parent=47 // pred_check
        %p471 = pneg %p150
      $region50: #{tpu_custom_call.1} parent=47 // pred_check_branch
        %473 = sbr.rel (%p471) target = $region52
      $region51: #{tpu_custom_call.1} parent=47 // pred_region
        %s474 = smul.u32 4, %s17
        %p475 = scmp.lt.s32.totalorder %s474, 7
        %s476 = scalar_select %p475, %s474, 7
        %s477 = smul.addr %s476, 8
        %s478 = scalar_lea.vmem %s5, %s477
      $region52: #{tpu_custom_call.1} parent=47 // pred_fallthru
        _
    $region48: #{tpu_custom_call.1} parent=5 // pred_fallthru
      _
  $region6: #{tpu_custom_call.1} parent=0 // loop_footer
    %s15 = sadd.s32 1, %s11
  $region7: #{tpu_custom_call.1} parent=0 // loop_footer_branch
    %10 = sbr.rel target = $region3
  $region8: #{tpu_custom_call.1} parent=0 // loop_exit
    _

// kernel: tpu_custom_call.1
$region0: #{tpu_custom_call.1}
  #allocation0 [shape = 'u32[]', space=smem, size = 0x4, offset = 0x4, fixed_abs, tag = 'smem constant byte address 0x4 - core index']
  #allocation1 [shape = 'u32[144,128]{1,0:T(1,128)}', space=vmem, size = 0x12000, scoped, tag = 'internal scratch']
  %s0 = inlined_call_operand.vmem [shape: f32[64,32], index: 0, kind: input, shape index: {}]
  %s1 = inlined_call_operand.vmem [shape: f32[32,128], index: 1, kind: input, shape index: {}]
  %s2 = inlined_call_operand.vmem [shape: f32[1,128], index: 2, kind: input, shape index: {}]
  %s3 = inlined_call_operand.vmem [shape: f32[128,32], index: 3, kind: input, shape index: {}]
  %s4 = inlined_call_operand.vmem [shape: f32[1,32], index: 4, kind: input, shape index: {}]
  %s5 = inlined_call_operand.vmem [shape: f32[64,32], index: 5, kind: output, shape index: {}]
  %s6 = sld [smem:[#allocation0]]
  $region53: #{tpu_custom_call.1} parent=0
    _
  %s8 = ssub.s32 1, %s6
  %s9 = scalar_select 0, %s8, %s6
  loop: start=0, step=1, limit=4
  $region2: #{tpu_custom_call.1} parent=0 // loop_pre_header
    _
  $region3: #{tpu_custom_call.1} parent=0 // loop_header
    %s11 = sphi 0, %s15
    %p12 = scmp.ge.s32.totalorder %s11, 4
    %s21 = sphi 0, %s23
    %s24 = sphi 0, %s21
    %s25 = sphi 0, %s24
    %s41 = sphi 0, %s25
    %s45 = sphi 0, %s45
    %s47 = sphi 0, %s45
    %s48 = sphi 0, %s47
    %s62 = sphi 0, %s48
    %s66 = sphi 0, %s66
    %s68 = sphi 0, %s66
    %s69 = sphi 0, %s68
    %s83 = sphi 0, %s69
    %s87 = sphi 0, %s87
    %s89 = sphi 0, %s87
    %s90 = sphi 0, %s89
    %s104 = sphi 0, %s90
    %s108 = sphi 0, %s108
    %s110 = sphi 0, %s108
    %s111 = sphi 0, %s110
    %s125 = sphi 0, %s111
    %s131 = sphi 0, %s133
    %s134 = sphi 0, %s131
    %s135 = sphi 0, %s134
    %s151 = sphi 0, %s135
  $region4: #{tpu_custom_call.1} parent=0 // loop_header_branch
    %14 = sbr.rel (%p12) target = $region8
  $region5: #{tpu_custom_call.1} parent=0 // loop_body
    %s16 = ssub.s32 %s11, 1
    %s17 = ssub.s32 %s11, 2
    %s18 = sadd.s32 %s11, 1
    %s19 = ssub.s32 %s11, %s18
    %p20 = scmp.eq.s32.totalorder %s19, 0
    %s22 = sadd.s32 %s21, 1
    %s23 = scalar_select %p20, %s21, %s22
    %p26 = pneg %p20
    %p27 = scmp.eq.s32.totalorder %s11, 1
    %p28 = por %p26, %p27
    %p29 = scmp.ne.s32.totalorder %s21, %s24
    %p30 = scmp.eq.s32.totalorder %s11, 0
    %p31 = por %p29, %p30
    %p32 = scmp.ne.s32.totalorder %s21, %s24
    %p33 = scmp.eq.s32.totalorder %s16, 1
    %p34 = por %p32, %p33
    %p35 = scmp.ne.s32.totalorder %s24, %s25
    %p36 = scmp.eq.s32.totalorder %s16, 0
    %p37 = por %p35, %p36
    %p38 = scmp.ne.s32.totalorder %s24, %s25
    %p39 = scmp.eq.s32.totalorder %s17, 1
    %p40 = por %p38, %p39
    %p42 = scmp.ne.s32.totalorder %s25, %s41
    %p43 = scmp.eq.s32.totalorder %s17, 0
    %p44 = por %p42, %p43
    %s46 = sadd.s32 %s45, 1
    %p49 = scmp.eq.s32.totalorder %s11, 1
    %p50 = scmp.ne.s32.totalorder %s45, %s47
    %p51 = scmp.eq.s32.totalorder %s11, 0
    %p52 = por %p50, %p51
    %p53 = scmp.ne.s32.totalorder %s45, %s47
    %p54 = scmp.eq.s32.totalorder %s16, 1
    %p55 = por %p53, %p54
    %p56 = scmp.ne.s32.totalorder %s47, %s48
    %p57 = scmp.eq.s32.totalorder %s16, 0
    %p58 = por %p56, %p57
    %p59 = scmp.ne.s32.totalorder %s47, %s48
    %p60 = scmp.eq.s32.totalorder %s17, 1
    %p61 = por %p59, %p60
    %p63 = scmp.ne.s32.totalorder %s48, %s62
    %p64 = scmp.eq.s32.totalorder %s17, 0
    %p65 = por %p63, %p64
    %s67 = sadd.s32 %s66, 1
    %p70 = scmp.eq.s32.totalorder %s11, 1
    %p71 = scmp.ne.s32.totalorder %s66, %s68
    %p72 = scmp.eq.s32.totalorder %s11, 0
    %p73 = por %p71, %p72
    %p74 = scmp.ne.s32.totalorder %s66, %s68
    %p75 = scmp.eq.s32.totalorder %s16, 1
    %p76 = por %p74, %p75
    %p77 = scmp.ne.s32.totalorder %s68, %s69
    %p78 = scmp.eq.s32.totalorder %s16, 0
    %p79 = por %p77, %p78
    %p80 = scmp.ne.s32.totalorder %s68, %s69
    %p81 = scmp.eq.s32.totalorder %s17, 1
    %p82 = por %p80, %p81
    %p84 = scmp.ne.s32.totalorder %s69, %s83
    %p85 = scmp.eq.s32.totalorder %s17, 0
    %p86 = por %p84, %p85
    %s88 = sadd.s32 %s87, 1
    %p91 = scmp.eq.s32.totalorder %s11, 1
    %p92 = scmp.ne.s32.totalorder %s87, %s89
    %p93 = scmp.eq.s32.totalorder %s11, 0
    %p94 = por %p92, %p93
    %p95 = scmp.ne.s32.totalorder %s87, %s89
    %p96 = scmp.eq.s32.totalorder %s16, 1
    %p97 = por %p95, %p96
    %p98 = scmp.ne.s32.totalorder %s89, %s90
    %p99 = scmp.eq.s32.totalorder %s16, 0
    %p100 = por %p98, %p99
    %p101 = scmp.ne.s32.totalorder %s89, %s90
    %p102 = scmp.eq.s32.totalorder %s17, 1
    %p103 = por %p101, %p102
    %p105 = scmp.ne.s32.totalorder %s90, %s104
    %p106 = scmp.eq.s32.totalorder %s17, 0
    %p107 = por %p105, %p106
    %s109 = sadd.s32 %s108, 1
    %p112 = scmp.eq.s32.totalorder %s11, 1
    %p113 = scmp.ne.s32.totalorder %s108, %s110
    %p114 = scmp.eq.s32.totalorder %s11, 0
    %p115 = por %p113, %p114
    %p116 = scmp.ne.s32.totalorder %s108, %s110
    %p117 = scmp.eq.s32.totalorder %s16, 1
    %p118 = por %p116, %p117
    %p119 = scmp.ne.s32.totalorder %s110, %s111
    %p120 = scmp.eq.s32.totalorder %s16, 0
    %p121 = por %p119, %p120
    %p122 = scmp.ne.s32.totalorder %s110, %s111
    %p123 = scmp.eq.s32.totalorder %s17, 1
    %p124 = por %p122, %p123
    %p126 = scmp.ne.s32.totalorder %s111, %s125
    %p127 = scmp.eq.s32.totalorder %s17, 0
    %p128 = por %p126, %p127
    %s129 = ssub.s32 %s11, %s18
    %p130 = scmp.eq.s32.totalorder %s129, 0
    %s132 = sadd.s32 %s131, 1
    %s133 = scalar_select %p130, %s131, %s132
    %p136 = pneg %p130
    %p137 = scmp.eq.s32.totalorder %s11, 1
    %p138 = por %p136, %p137
    %p139 = scmp.ne.s32.totalorder %s131, %s134
    %p140 = scmp.eq.s32.totalorder %s11, 0
    %p141 = por %p139, %p140
    %p142 = scmp.ne.s32.totalorder %s131, %s134
    %p143 = scmp.eq.s32.totalorder %s16, 1
    %p144 = por %p142, %p143
    %p145 = scmp.ne.s32.totalorder %s134, %s135
    %p146 = scmp.eq.s32.totalorder %s16, 0
    %p147 = por %p145, %p146
    %p148 = scmp.ne.s32.totalorder %s134, %s135
    %p149 = scmp.eq.s32.totalorder %s17, 1
    %p150 = por %p148, %p149
    %p152 = scmp.ne.s32.totalorder %s135, %s151
    %p153 = scmp.eq.s32.totalorder %s17, 0
    %p154 = por %p152, %p153
    %p155 = scmp.le.s32.totalorder 1, %s11
    %p156 = scmp.lt.s32.totalorder %s11, 3
    %p157 = pnand %p155, %p156
    %p158 = pneg %p157
    // Predicated region
    $region9: #{tpu_custom_call.1} parent=5 // pred_check
      _
    $region10: #{tpu_custom_call.1} parent=5 // pred_check_branch
      %160 = sbr.rel (%p157) target = $region12
    $region11: #{tpu_custom_call.1} parent=5 // pred_region
      %s161 = ssub.s32 %s11, 1
      // Predicated region
      $region13: #{tpu_custom_call.1} parent=11 // pred_check
        %p162 = pneg %p58
      $region14: #{tpu_custom_call.1} parent=11 // pred_check_branch
        %164 = sbr.rel (%p162) target = $region16
      $region15: #{tpu_custom_call.1} parent=11 // pred_region
        _
      $region16: #{tpu_custom_call.1} parent=11 // pred_fallthru
        _
      // Predicated region
      $region17: #{tpu_custom_call.1} parent=11 // pred_check
        %p165 = pneg %p79
      $region18: #{tpu_custom_call.1} parent=11 // pred_check_branch
        %167 = sbr.rel (%p165) target = $region20
      $region19: #{tpu_custom_call.1} parent=11 // pred_region
        _
      $region20: #{tpu_custom_call.1} parent=11 // pred_fallthru
        _
      // Predicated region
      $region21: #{tpu_custom_call.1} parent=11 // pred_check
        %p168 = pneg %p100
      $region22: #{tpu_custom_call.1} parent=11 // pred_check_branch
        %170 = sbr.rel (%p168) target = $region24
      $region23: #{tpu_custom_call.1} parent=11 // pred_region
        _
      $region24: #{tpu_custom_call.1} parent=11 // pred_fallthru
        _
      // Predicated region
      $region25: #{tpu_custom_call.1} parent=11 // pred_check
        %p171 = pneg %p121
      $region26: #{tpu_custom_call.1} parent=11 // pred_check_branch
        %173 = sbr.rel (%p171) target = $region28
      $region27: #{tpu_custom_call.1} parent=11 // pred_region
        _
      $region28: #{tpu_custom_call.1} parent=11 // pred_fallthru
        _
    $region12: #{tpu_custom_call.1} parent=5 // pred_fallthru
      _
    %p174 = scmp.lt.s32.totalorder %s11, 2
    // Predicated region
    $region29: #{tpu_custom_call.1} parent=5 // pred_check
      %p175 = pneg %p174
    $region30: #{tpu_custom_call.1} parent=5 // pred_check_branch
      %177 = sbr.rel (%p175) target = $region32
    $region31: #{tpu_custom_call.1} parent=5 // pred_region
      // Predicated region
      $region33: #{tpu_custom_call.1} parent=31 // pred_check
        %p178 = pneg %p31
      $region34: #{tpu_custom_call.1} parent=31 // pred_check_branch
        %180 = sbr.rel (%p178) target = $region36
      $region35: #{tpu_custom_call.1} parent=31 // pred_region
        %s181 = smul.u32 4, %s11
        %p182 = scmp.lt.s32.totalorder %s181, 7
        %s183 = scalar_select %p182, %s181, 7
        %s184 = smul.addr %s183, 8
        %s185 = scalar_lea.vmem %s0, %s184
        %s186 = smul.u32 4, %s11
      $region36: #{tpu_custom_call.1} parent=31 // pred_fallthru
        _
    $region32: #{tpu_custom_call.1} parent=5 // pred_fallthru
      _
    %p187 = scmp.le.s32.totalorder 1, %s11
    %p188 = scmp.lt.s32.totalorder %s11, 3
    %p189 = pnand %p187, %p188
    %p190 = pneg %p189
    // Predicated region
    $region37: #{tpu_custom_call.1} parent=5 // pred_check
      _
    $region38: #{tpu_custom_call.1} parent=5 // pred_check_branch
      %192 = sbr.rel (%p189) target = $region40
    $region39: #{tpu_custom_call.1} parent=5 // pred_region
      %s193 = ssub.s32 %s11, 1
      %s194 = smul.u32 4, %s16
      %p195 = scmp.lt.s32.totalorder %s194, 7
      %s196 = scalar_select %p195, %s194, 7
      %s197 = smul.addr %s196, 8
      %s198 = scalar_lea.vmem %s0, %s197
      %p199 = pneg %p37
      %p200 = pneg %p34
      %p201 = pneg %p58
      %p202 = pneg %p55
      %p203 = pneg %p79
      %p204 = pneg %p76
      %p205 = pneg %p100
      %p206 = pneg %p97
      %p207 = pneg %p121
      %p208 = pneg %p118
      %p209 = pneg %p147
      %p210 = pneg %p144
      %s211 = smul.u32 4, %s16
      %p212 = scmp.lt.s32.totalorder %s211, 7
      %s213 = scalar_select %p212, %s211, 7
      %s214 = smul.addr %s213, 8
      %s215 = scalar_lea.vmem %s5, %s214
      %s216 = smul.u32 4, %s16
      %p217 = scmp.lt.s32.totalorder %s216, 7
      %s218 = scalar_select %p217, %s216, 7
      %s219 = smul.addr %s218, 8
      %s220 = scalar_lea.vmem %s0, %s219
      %s221 = smul.u32 4, %s16
      %s222 = smul.u32 4, %s16
      %p223 = scmp.lt.s32.totalorder %s222, 7
      %s224 = scalar_select %p223, %s222, 7
      %s225 = smul.addr %s224, 8
      %s226 = scalar_lea.vmem %s5, %s225
      %s227 = smul.u32 4, %s16
      %v228 = vld [vmem:[%s220] sm:$0xff]
      %v229 = vld [vmem:[%s220 + $0x8] sm:$0xff]
      %v230 = vld [vmem:[%s220 + $0x10] sm:$0xff]
      %v231 = vld [vmem:[%s220 + $0x18] sm:$0xff]
      %v232 = vld [vmem:[%s1] sm:$0xff]
      %v233 = vld [vmem:[%s1 + $0x8] sm:$0xff]
      %v234 = vld [vmem:[%s1 + $0x10] sm:$0xff]
      %v235 = vld [vmem:[%s1 + $0x18] sm:$0xff]
      %v236 = vld [vmem:[%s2] sm:$0x1]
      %v238 = vlaneseq
      %v239 = vshrl.u32 %v238, 7
      %v240 = vsub.s32 0, %v239
      %v241 = vrot.slane %v236, %v240
      %vm243 = vcmask 261120
      %v245 = vsel %vm243, %v228, 0
      %v248 = vsel %vm243, %v229, 0
      %v251 = vsel %vm243, %v230, 0
      %v254 = vsel %vm243, %v231, 0
      %256 = vmatprep.subr.mxu0 0.0
      %257 = vmatpush1.msra.mxu0 0.0
      %258 = vmatprep.subr.mxu0 0.0
      %259 = vmatpush1.msra.mxu0 0.0
      %260 = vmatprep.subr.mxu0 0.0
      %261 = vmatpush1.msra.mxu0 0.0
      %262 = vmatprep.subr.mxu0 0.0
      %263 = vmatpush1.msra.mxu0 0.0
      %264 = vmatprep.subr.mxu0 0.0
      %265 = vmatpush1.msra.mxu0 0.0
      %266 = vmatprep.subr.mxu0 0.0
      %267 = vmatpush1.msra.mxu0 0.0
      %268 = vmatprep.subr.mxu0 0.0
      %269 = vmatpush1.msra.mxu0 0.0
      %270 = vmatprep.subr.mxu0 0.0
      %271 = vmatpush1.msra.mxu0 0.0
      %272 = vmatprep.subr.mxu0 0.0
      %273 = vmatpush1.msra.mxu0 0.0
      %274 = vmatprep.subr.mxu0 0.0
      %275 = vmatpush1.msra.mxu0 0.0
      %276 = vmatprep.subr.mxu0 0.0
      %277 = vmatpush1.msra.mxu0 0.0
      %278 = vmatprep.subr.mxu0 0.0
      %279 = vmatpush1.msra.mxu0 0.0
      %280 = vmatprep.subr.mxu0 0.0
      %281 = vmatpush1.msra.mxu0 %v235
      %282 = vmatprep.subr.mxu0 0.0
      %283 = vmatpush1.msra.mxu0 %v234
      %284 = vmatprep.subr.mxu0 0.0
      %285 = vmatpush1.msra.mxu0 %v233
      %286 = vmatprep.subr.mxu0 0.0
      %287 = vmatpush1.msra.mxu0 %v232
      %288 = vmatprep.subr.mxu0 0.0
      %289 = vmatpush2.msra.mxu0 0.0
      %290 = vmatprep.subr.mxu0 0.0
      %291 = vmatpush2.msra.mxu0 0.0
      %292 = vmatprep.subr.mxu0 0.0
      %293 = vmatpush2.msra.mxu0 0.0
      %294 = vmatprep.subr.mxu0 0.0
      %295 = vmatpush2.msra.mxu0 0.0
      %296 = vmatprep.subr.mxu0 0.0
      %297 = vmatpush2.msra.mxu0 0.0
      %298 = vmatprep.subr.mxu0 0.0
      %299 = vmatpush2.msra.mxu0 0.0
      %300 = vmatprep.subr.mxu0 0.0
      %301 = vmatpush2.msra.mxu0 0.0
      %302 = vmatprep.subr.mxu0 0.0
      %303 = vmatpush2.msra.mxu0 0.0
      %304 = vmatprep.subr.mxu0 0.0
      %305 = vmatpush2.msra.mxu0 0.0
      %306 = vmatprep.subr.mxu0 0.0
      %307 = vmatpush2.msra.mxu0 0.0
      %308 = vmatprep.subr.mxu0 0.0
      %309 = vmatpush2.msra.mxu0 0.0
      %310 = vmatprep.subr.mxu0 0.0
      %311 = vmatpush2.msra.mxu0 0.0
      %312 = vmatprep.subr.mxu0 0.0
      %313 = vmatpush2.msra.mxu0 0.0
      %314 = vmatprep.subr.mxu0 0.0
      %315 = vmatpush2.msra.mxu0 0.0
      %316 = vmatprep.subr.mxu0 0.0
      %317 = vmatpush2.msra.mxu0 0.0
      %318 = vmatprep.subr.mxu0 0.0
      %319 = vmatpush2.msra.mxu0 0.0
      %320 = vmatprep.mubr.f32.mxu0 0.0
      %321 = vmatmul.mubr.f32.gmra.mxu0 %v245
      %v322 = vpop.f32.mrf.mxu0
      %v323 = vadd.f32 %v241, %v322
      %v324 = vpop.f32.mrf.mxu0
      %325 = vmatprep.mubr.f32.mxu0 0.0
      %326 = vmatmul.mubr.f32.gmra.mxu0 %v248
      %v327 = vpop.f32.mrf.mxu0
      %v328 = vadd.f32 %v241, %v327
      %v329 = vpop.f32.mrf.mxu0
      %330 = vmatprep.mubr.f32.mxu0 0.0
      %331 = vmatmul.mubr.f32.gmra.mxu0 %v251
      %v332 = vpop.f32.mrf.mxu0
      %v333 = vadd.f32 %v241, %v332
      %v334 = vpop.f32.mrf.mxu0
      %335 = vmatprep.mubr.f32.mxu0 0.0
      %336 = vmatmul.mubr.f32.gmra.mxu0 %v254
      %v337 = vpop.f32.mrf.mxu0
      %v338 = vadd.f32 %v241, %v337
      %v339 = vpop.f32.mrf.mxu0
      %340 = vdwg.mxu0
      %v341 = vtanh.pop %v323
      %v342 = vtanh.pop %v328
      %v343 = vtanh.pop %v333
      %v344 = vtanh.pop %v338
      %v345 = vld [vmem:[%s3] sm:$0xff]
      %v346 = vld [vmem:[%s3 + $0x8] sm:$0xff]
      %v347 = vld [vmem:[%s3 + $0x10] sm:$0xff]
      %v348 = vld [vmem:[%s3 + $0x18] sm:$0xff]
      %v349 = vld [vmem:[%s3 + $0x20] sm:$0xff]
      %v350 = vld [vmem:[%s3 + $0x28] sm:$0xff]
      %v351 = vld [vmem:[%s3 + $0x30] sm:$0xff]
      %v352 = vld [vmem:[%s3 + $0x38] sm:$0xff]
      %v353 = vld [vmem:[%s3 + $0x40] sm:$0xff]
      %v354 = vld [vmem:[%s3 + $0x48] sm:$0xff]
      %v355 = vld [vmem:[%s3 + $0x50] sm:$0xff]
      %v356 = vld [vmem:[%s3 + $0x58] sm:$0xff]
      %v357 = vld [vmem:[%s3 + $0x60] sm:$0xff]
      %v358 = vld [vmem:[%s3 + $0x68] sm:$0xff]
      %v359 = vld [vmem:[%s3 + $0x70] sm:$0xff]
      %v360 = vld [vmem:[%s3 + $0x78] sm:$0xff]
      %v361 = vld [vmem:[%s4] sm:$0x1]
      %v363 = vlaneseq
      %v364 = vshrl.u32 %v363, 7
      %v365 = vsub.s32 0, %v364
      %v366 = vrot.slane %v361, %v365
      %368 = vmatprep.subr.mxu0 0.0
      %369 = vmatpush1.msra.mxu0 %v360
      %370 = vmatprep.subr.mxu0 0.0
      %371 = vmatpush1.msra.mxu0 %v359
      %372 = vmatprep.subr.mxu0 0.0
      %373 = vmatpush1.msra.mxu0 %v358
      %374 = vmatprep.subr.mxu0 0.0
      %375 = vmatpush1.msra.mxu0 %v357
      %376 = vmatprep.subr.mxu0 0.0
      %377 = vmatpush1.msra.mxu0 %v356
      %378 = vmatprep.subr.mxu0 0.0
      %379 = vmatpush1.msra.mxu0 %v355
      %380 = vmatprep.subr.mxu0 0.0
      %381 = vmatpush1.msra.mxu0 %v354
      %382 = vmatprep.subr.mxu0 0.0
      %383 = vmatpush1.msra.mxu0 %v353
      %384 = vmatprep.subr.mxu0 0.0
      %385 = vmatpush1.msra.mxu0 %v352
      %386 = vmatprep.subr.mxu0 0.0
      %387 = vmatpush1.msra.mxu0 %v351
      %388 = vmatprep.subr.mxu0 0.0
      %389 = vmatpush1.msra.mxu0 %v350
      %390 = vmatprep.subr.mxu0 0.0
      %391 = vmatpush1.msra.mxu0 %v349
      %392 = vmatprep.subr.mxu0 0.0
      %393 = vmatpush1.msra.mxu0 %v348
      %394 = vmatprep.subr.mxu0 0.0
      %395 = vmatpush1.msra.mxu0 %v347
      %396 = vmatprep.subr.mxu0 0.0
      %397 = vmatpush1.msra.mxu0 %v346
      %398 = vmatprep.subr.mxu0 0.0
      %399 = vmatpush1.msra.mxu0 %v345
      %400 = vmatprep.subr.mxu0 0.0
      %401 = vmatpush2.msra.mxu0 0.0
      %402 = vmatprep.subr.mxu0 0.0
      %403 = vmatpush2.msra.mxu0 0.0
      %404 = vmatprep.subr.mxu0 0.0
      %405 = vmatpush2.msra.mxu0 0.0
      %406 = vmatprep.subr.mxu0 0.0
      %407 = vmatpush2.msra.mxu0 0.0
      %408 = vmatprep.subr.mxu0 0.0
      %409 = vmatpush2.msra.mxu0 0.0
      %410 = vmatprep.subr.mxu0 0.0
      %411 = vmatpush2.msra.mxu0 0.0
      %412 = vmatprep.subr.mxu0 0.0
      %413 = vmatpush2.msra.mxu0 0.0
      %414 = vmatprep.subr.mxu0 0.0
      %415 = vmatpush2.msra.mxu0 0.0
      %416 = vmatprep.subr.mxu0 0.0
      %417 = vmatpush2.msra.mxu0 0.0
      %418 = vmatprep.subr.mxu0 0.0
      %419 = vmatpush2.msra.mxu0 0.0
      %420 = vmatprep.subr.mxu0 0.0
      %421 = vmatpush2.msra.mxu0 0.0
      %422 = vmatprep.subr.mxu0 0.0
      %423 = vmatpush2.msra.mxu0 0.0
      %424 = vmatprep.subr.mxu0 0.0
      %425 = vmatpush2.msra.mxu0 0.0
      %426 = vmatprep.subr.mxu0 0.0
      %427 = vmatpush2.msra.mxu0 0.0
      %428 = vmatprep.subr.mxu0 0.0
      %429 = vmatpush2.msra.mxu0 0.0
      %430 = vmatprep.subr.mxu0 0.0
      %431 = vmatpush2.msra.mxu0 0.0
      %432 = vmatprep.mubr.f32.mxu0 0.0
      %433 = vmatmul.mubr.f32.gmra.mxu0 %v341
      %v434 = vpop.f32.mrf.mxu0
      %v435 = vadd.f32 %v366, %v434
      %v436 = vpop.f32.mrf.mxu0
      %437 = vmatprep.mubr.f32.mxu0 0.0
      %438 = vmatmul.mubr.f32.gmra.mxu0 %v342
      %v439 = vpop.f32.mrf.mxu0
      %v440 = vadd.f32 %v366, %v439
      %v441 = vpop.f32.mrf.mxu0
      %442 = vmatprep.mubr.f32.mxu0 0.0
      %443 = vmatmul.mubr.f32.gmra.mxu0 %v343
      %v444 = vpop.f32.mrf.mxu0
      %v445 = vadd.f32 %v366, %v444
      %v446 = vpop.f32.mrf.mxu0
      %447 = vmatprep.mubr.f32.mxu0 0.0
      %448 = vmatmul.mubr.f32.gmra.mxu0 %v344
      %v449 = vpop.f32.mrf.mxu0
      %v450 = vadd.f32 %v366, %v449
      %v451 = vpop.f32.mrf.mxu0
      %452 = vdwg.mxu0
      %453 = vst.msk [vmem:[%s226] sm:$0xff] %vm243, %v435
      %454 = vst.msk [vmem:[%s226 + $0x8] sm:$0xff] %vm243, %v440
      %455 = vst.msk [vmem:[%s226 + $0x10] sm:$0xff] %vm243, %v445
      %456 = vst.msk [vmem:[%s226 + $0x18] sm:$0xff] %vm243, %v450
      %s457 = smul.u32 4, %s16
      %p458 = scmp.lt.s32.totalorder %s457, 7
      %s459 = scalar_select %p458, %s457, 7
      %s460 = smul.addr %s459, 8
      %s461 = scalar_lea.vmem %s5, %s460
      // Predicated region
      $region41: #{tpu_custom_call.1} parent=39 // pred_check
        %p462 = pneg %p144
      $region42: #{tpu_custom_call.1} parent=39 // pred_check_branch
        %464 = sbr.rel (%p462) target = $region44
      $region43: #{tpu_custom_call.1} parent=39 // pred_region
        %s465 = smul.u32 4, %s16
      $region44: #{tpu_custom_call.1} parent=39 // pred_fallthru
        _
    $region40: #{tpu_custom_call.1} parent=5 // pred_fallthru
      _
    %p466 = scmp.le.s32.totalorder 2, %s11
    // Predicated region
    $region45: #{tpu_custom_call.1} parent=5 // pred_check
      %p467 = pneg %p466
    $region46: #{tpu_custom_call.1} parent=5 // pred_check_branch
      %469 = sbr.rel (%p467) target = $region48
    $region47: #{tpu_custom_call.1} parent=5 // pred_region
      %s470 = ssub.s32 %s11, 2
      // Predicated region
      $region49: #{tpu_custom_call.1} parent=47 // pred_check
        %p471 = pneg %p150
      $region50: #{tpu_custom_call.1} parent=47 // pred_check_branch
        %473 = sbr.rel (%p471) target = $region52
      $region51: #{tpu_custom_call.1} parent=47 // pred_region
        %s474 = smul.u32 4, %s17
        %p475 = scmp.lt.s32.totalorder %s474, 7
        %s476 = scalar_select %p475, %s474, 7
        %s477 = smul.addr %s476, 8
        %s478 = scalar_lea.vmem %s5, %s477
      $region52: #{tpu_custom_call.1} parent=47 // pred_fallthru
        _
    $region48: #{tpu_custom_call.1} parent=5 // pred_fallthru
      _
  $region6: #{tpu_custom_call.1} parent=0 // loop_footer
    %s15 = sadd.s32 1, %s11
  $region7: #{tpu_custom_call.1} parent=0 // loop_footer_branch
    %10 = sbr.rel target = $region3
  $region8: #{tpu_custom_call.1} parent=0 // loop_exit
    _

</llo_original>
